<compile_context>
chip_gen: v5e
topology: v5e:2x2
jax: 0.10.0
libtpu: 0.0.40
codegen_flags: <defaults>
</compile_context>

<pallas_src>
import functools

import jax
import jax.numpy as jnp
from jax.experimental import pallas as pl
from jax.experimental.pallas import tpu as pltpu


# ---------------------------------------------------------------------------
# Kernels
# ---------------------------------------------------------------------------

def _fc(pooled_f32, w1t_ref, w2t_ref):
    """sigmoid(relu(pooled @ W1^T) @ W2^T); weights pre-transposed in the wrapper."""
    h = jnp.dot(pooled_f32, w1t_ref[...], preferred_element_type=jnp.float32)
    h = jnp.maximum(h, 0.0)
    s = jnp.dot(h, w2t_ref[...], preferred_element_type=jnp.float32)
    return jax.nn.sigmoid(s)                                       # (bt, C2) f32


def se_fused_kernel(x_ref, w1t_ref, w2t_ref, o_ref):
    # x_ref/o_ref: (bt, C2, HW); w1t_ref: (C2, HID); w2t_ref: (HID, C2)
    # Pool (mean over HW) with f32 accumulation (bf16-safe).
    pooled = jnp.mean(x_ref[...].astype(jnp.float32), axis=-1)     # (bt, C2)
    s = _fc(pooled, w1t_ref, w2t_ref).astype(x_ref.dtype)          # (bt, C2)
    # Re-read x_ref at the store instead of keeping the block live across the FC.
    o_ref[...] = x_ref[...] * s[:, :, None]


def se_pool_kernel(x_ref, sum_ref, *, hw, thw):
    # x_ref: (1, C2, thw); sum_ref: (B, C2) f32 -- resident for the whole grid.
    i = pl.program_id(0)
    j = pl.program_id(1)

    @pl.when(jnp.logical_and(i == 0, j == 0))
    def _():
        sum_ref[...] = jnp.zeros_like(sum_ref)

    x = x_ref[...].astype(jnp.float32)
    if hw % thw != 0:  # compile-time decision: mask the ragged last HW tile
        col = j * thw + jax.lax.broadcasted_iota(jnp.int32, x.shape, 2)
        x = jnp.where(col < hw, x, 0.0)
    sum_ref[pl.ds(i, 1), :] += jnp.sum(x, axis=-1)                  # (1, C2)


def se_scale_kernel(sum_ref, w1t_ref, w2t_ref, x_ref, o_ref, *, inv_hw):
    # sum_ref: (B, C2) f32 resident; x_ref/o_ref: (1, C2, thw)
    i = pl.program_id(0)
    pooled = sum_ref[pl.ds(i, 1), :] * inv_hw                       # (1, C2) f32
    s = _fc(pooled, w1t_ref, w2t_ref).astype(x_ref.dtype)           # (1, C2)
    o_ref[...] = x_ref[...] * s[:, :, None]


# ---------------------------------------------------------------------------
# Wrapper
# ---------------------------------------------------------------------------

def _vmem_capacity_bytes():
    try:
        return int(pltpu.get_tpu_info().vmem_capacity_bytes)
    except Exception:
        return 64 * 1024 * 1024  # conservative fallback (v7x physical VMEM)


def se_layer_s(x, w1, w2, *, force_two_pass=False):
    """SELayerS forward.  x: (B, C, 2, H, W); w1: (HID, 2C); w2: (2C, HID)."""
    b, c, d, hh, ww = x.shape
    assert d == 2, "SELayerS requires depth == 2 (y.expand_as(x))"
    c2 = 2 * c
    hw = hh * ww
    hid = w1.shape[0]
    assert w1.shape == (hid, c2) and w2.shape == (c2, hid)

    # (C, D) flatten matches torch's y.view(b, 2*c) / y.view(b, c, 2, 1, 1).
    x3 = x.reshape(b, c2, hw)
    # One-time layout fixups outside the kernel: no in-kernel transposes.
    w1_t = w1.T          # (C2, HID): pooled @ w1_t
    w2_t = w2.T          # (HID, C2): h @ w2_t

    itemsize = x3.dtype.itemsize
    per_batch = c2 * hw * itemsize
    weights_bytes = (w1_t.size + w2_t.size) * jnp.dtype(w1_t.dtype).itemsize
    vmem_cap = _vmem_capacity_bytes()
    headroom = 2 * 1024 * 1024
    budget = int(vmem_cap * 0.85) - weights_bytes - headroom

    cost = pl.CostEstimate(
        flops=int(3 * x3.size + 4 * b * c2 * hid),
        transcendentals=int(b * c2),
        bytes_accessed=int(2 * x3.size * itemsize + weights_bytes),
    )

    bt_vmem = budget // (4 * per_batch) if budget > 0 else 0
    use_two_pass = force_two_pass or bt_vmem < 1

    if not use_two_pass:
        # ---------------- fused single-pass path ----------------
        target_block = 4 * 1024 * 1024                     # MiB-scale blocks
        bt = max(1, min(b, int(bt_vmem), max(1, target_block // per_batch)))
        # Keep >= min(4, B) grid steps: megacore split on v7x + pipeline depth.
        min_steps = min(4, b)
        bt = max(1, min(bt, pl.cdiv(b, min_steps)))
        grid_b = pl.cdiv(b, bt)

        needed = 4 * bt * per_batch + weights_bytes + headroom
        vmem_limit = int(min(max(needed, 32 * 1024 * 1024), int(vmem_cap * 0.9)))

        out = pl.pallas_call(
            se_fused_kernel,
            out_shape=jax.ShapeDtypeStruct((b, c2, hw), x3.dtype),
            grid=(grid_b,),
            in_specs=[
                pl.BlockSpec((bt, c2, hw), lambda i: (i, 0, 0)),   # x batch block
                pl.BlockSpec((c2, hid), lambda i: (0, 0)),         # w1^T (resident)
                pl.BlockSpec((hid, c2), lambda i: (0, 0)),         # w2^T (resident)
            ],
            out_specs=pl.BlockSpec((bt, c2, hw), lambda i: (i, 0, 0)),
            compiler_params=pltpu.CompilerParams(
                dimension_semantics=("parallel",),
                vmem_limit_bytes=vmem_limit,
            ),
            cost_estimate=cost,
        )(x3, w1_t, w2_t)
        return out.reshape(b, c, d, hh, ww)

    # ---------------- two-pass path (oversized (C2, HW) slabs) ----------------
    pooled_bytes = b * c2 * 4
    budget2 = int(vmem_cap * 0.85) - weights_bytes - pooled_bytes - headroom
    blk_elems = (4 * 1024 * 1024) // (c2 * itemsize)
    thw = min(hw, max(128, (blk_elems // 128) * 128))      # lane-dense HW tiles
    while thw > 128 and 4 * c2 * thw * itemsize > budget2:
        thw = max(128, ((thw // 2) // 128) * 128)
    thw = min(thw, hw)
    grid_hw = pl.cdiv(hw, thw)

    vmem_limit2 = int(min(
        max(4 * c2 * thw * itemsize + weights_bytes + pooled_bytes + headroom,
            32 * 1024 * 1024),
        int(vmem_cap * 0.9)))

    # Pass 1: pooled f32 sums (B, C2).  Output block is the full array and stays
    # resident across the grid, so both axes are "arbitrary" (single-core loop).
    pooled_sum = pl.pallas_call(
        functools.partial(se_pool_kernel, hw=hw, thw=thw),
        out_shape=jax.ShapeDtypeStruct((b, c2), jnp.float32),
        grid=(b, grid_hw),
        in_specs=[pl.BlockSpec((1, c2, thw), lambda i, j: (i, 0, j))],
        out_specs=pl.BlockSpec((b, c2), lambda i, j: (0, 0)),
        compiler_params=pltpu.CompilerParams(
            dimension_semantics=("arbitrary", "arbitrary"),
            vmem_limit_bytes=vmem_limit2,
        ),
    )(x3)

    # Pass 2: recompute the tiny FC per tile and apply the channel scale.
    out = pl.pallas_call(
        functools.partial(se_scale_kernel, inv_hw=1.0 / hw),
        out_shape=jax.ShapeDtypeStruct((b, c2, hw), x3.dtype),
        grid=(b, grid_hw),
        in_specs=[
            pl.BlockSpec((b, c2), lambda i, j: (0, 0)),            # pooled sums (resident)
            pl.BlockSpec((c2, hid), lambda i, j: (0, 0)),          # w1^T (resident)
            pl.BlockSpec((hid, c2), lambda i, j: (0, 0)),          # w2^T (resident)
            pl.BlockSpec((1, c2, thw), lambda i, j: (i, 0, j)),    # x tile
        ],
        out_specs=pl.BlockSpec((1, c2, thw), lambda i, j: (i, 0, j)),
        compiler_params=pltpu.CompilerParams(
            dimension_semantics=("parallel", "parallel"),
            vmem_limit_bytes=vmem_limit2,
        ),
        cost_estimate=cost,
    )(pooled_sum, w1_t, w2_t, x3)
    return out.reshape(b, c, d, hh, ww)


# ---------------------------------------------------------------------------
# Pure-JAX reference + demo
# ---------------------------------------------------------------------------

def se_layer_s_ref(x, w1, w2):
    """Pure-JAX reference mirroring the PyTorch forward."""
    b, c, d, hh, ww = x.shape
    y = jnp.mean(x.astype(jnp.float32), axis=(3, 4))   # (b, c, 2) == AdaptiveAvgPool3d((2,1,1))
    y = y.reshape(b, 2 * c)
    y = jnp.maximum(y @ w1.T, 0.0)
    y = jax.nn.sigmoid(y @ w2.T)
    return x * y.reshape(b, c, 2, 1, 1).astype(x.dtype)


if __name__ == "__main__":
    # Module config: channel=C=32, reduction=16 -> internal channel C2 = 64,
    # hidden = 64 // 16 = 4.  H=W=16 so HW = 256 (lane-dense, multiple of 128).
    B, C, D, H, W = 2, 32, 2, 16, 16
    REDUCTION = 16
    C2 = 2 * C
    HID = C2 // REDUCTION

    key = jax.random.PRNGKey(0)
    kx, k1, k2 = jax.random.split(key, 3)

    x = jax.random.normal(kx, (B, C, D, H, W), dtype=jnp.float32)
    # Deterministic synthetic weights (shapes of nn.Linear(C2, HID) / nn.Linear(HID, C2)).
    w1 = jax.random.normal(k1, (HID, C2), dtype=jnp.float32) * 0.1
    w2 = jax.random.normal(k2, (C2, HID), dtype=jnp.float32) * 0.1

    ref = se_layer_s_ref(x, w1, w2)

    # Fused single-pass path.
    out = jax.block_until_ready(se_layer_s(x, w1, w2))
    assert out.shape == (B, C, D, H, W)
    assert jnp.allclose(out, ref, atol=1e-5, rtol=1e-5), "fused kernel mismatch vs reference"

    # Two-pass (large-HW fallback) path, forced at the small demo shape.
    out2 = jax.block_until_ready(se_layer_s(x, w1, w2, force_two_pass=True))
    assert jnp.allclose(out2, ref, atol=1e-5, rtol=1e-5), "two-pass kernel mismatch vs reference"

    print("KERNEL_OK")
</pallas_src>

<mosaic_0001>
module attributes {stable_mosaic.version = 11 : i64} {
  func.func @se_fused_kernel(%arg0: i32, %arg1: memref<1x64x256xf32, #tpu.memory_space<vmem>>, %arg2: memref<64x4xf32, #tpu.memory_space<vmem>>, %arg3: memref<4x64xf32, #tpu.memory_space<vmem>>, %arg4: memref<1x64x256xf32, #tpu.memory_space<vmem>>) attributes {dimension_semantics = [#tpu.dimension_semantics<parallel>], iteration_bounds = array<i64: 2>, scalar_prefetch = 0 : i64, scratch_operands = 0 : i64, tpu.core_type = #tpu.core_type<tc>, window_params = [{transform_indices = @transform_0, window_bounds = array<i64: 1, 64, 256>}, {pipeline_mode = #tpu.pipeline_mode<synchronous>, transform_indices = @transform_1, window_bounds = array<i64: 64, 4>}, {pipeline_mode = #tpu.pipeline_mode<synchronous>, transform_indices = @transform_2, window_bounds = array<i64: 4, 64>}, {transform_indices = @transform_3, window_bounds = array<i64: 1, 64, 256>}]} {
    %c0 = arith.constant 0 : index
    %c0_0 = arith.constant 0 : index
    %c0_1 = arith.constant 0 : index
    %0 = vector.load %arg1[%c0, %c0_0, %c0_1] : memref<1x64x256xf32, #tpu.memory_space<vmem>>, vector<1x64x256xf32>
    %cst = arith.constant dense<0.000000e+00> : vector<1x64xf32>
    %1 = vector.multi_reduction <add>, %0, %cst [2] : vector<1x64x256xf32> to vector<1x64xf32>
    %cst_2 = arith.constant 2.560000e+02 : f32
    %2 = vector.broadcast %cst_2 : f32 to vector<1x64xf32>
    %3 = arith.divf %1, %2 : vector<1x64xf32>
    %c0_3 = arith.constant 0 : index
    %c0_4 = arith.constant 0 : index
    %4 = vector.load %arg2[%c0_3, %c0_4] : memref<64x4xf32, #tpu.memory_space<vmem>>, vector<64x4xf32>
    %cst_5 = arith.constant dense<0.000000e+00> : vector<1x4xf32>
    %5 = tpu.matmul %3, %4, %cst_5 {dimension_numbers = #tpu.dot_dimension_numbers<[1], [0], [0], [1], [0, 0, 1, 1], [], []>} : vector<1x64xf32>, vector<64x4xf32>, vector<1x4xf32> -> vector<1x4xf32>
    %cst_6 = arith.constant 0.000000e+00 : f32
    %6 = vector.broadcast %cst_6 : f32 to vector<1x4xf32>
    %7 = arith.maximumf %5, %6 : vector<1x4xf32>
    %c0_7 = arith.constant 0 : index
    %c0_8 = arith.constant 0 : index
    %8 = vector.load %arg3[%c0_7, %c0_8] : memref<4x64xf32, #tpu.memory_space<vmem>>, vector<4x64xf32>
    %cst_9 = arith.constant dense<0.000000e+00> : vector<1x64xf32>
    %9 = tpu.matmul %7, %8, %cst_9 {dimension_numbers = #tpu.dot_dimension_numbers<[1], [0], [0], [1], [0, 0, 1, 1], [], []>} : vector<1x4xf32>, vector<4x64xf32>, vector<1x64xf32> -> vector<1x64xf32>
    %10 = arith.negf %9 : vector<1x64xf32>
    %11 = math.exp %10 : vector<1x64xf32>
    %cst_10 = arith.constant 1.000000e+00 : f32
    %12 = vector.broadcast %cst_10 : f32 to vector<1x64xf32>
    %13 = arith.addf %12, %11 : vector<1x64xf32>
    %14 = arith.divf %12, %13 : vector<1x64xf32>
    %c0_11 = arith.constant 0 : index
    %c0_12 = arith.constant 0 : index
    %c0_13 = arith.constant 0 : index
    %15 = vector.load %arg1[%c0_11, %c0_12, %c0_13] : memref<1x64x256xf32, #tpu.memory_space<vmem>>, vector<1x64x256xf32>
    %16 = vector.shape_cast %14 : vector<1x64xf32> to vector<1x64x1xf32>
    %17 = vector.broadcast %16 : vector<1x64x1xf32> to vector<1x64x256xf32>
    %18 = arith.mulf %15, %17 : vector<1x64x256xf32>
    %c0_14 = arith.constant 0 : index
    %c0_15 = arith.constant 0 : index
    %c0_16 = arith.constant 0 : index
    %19 = vector.load %arg4[%c0_14, %c0_15, %c0_16] : memref<1x64x256xf32, #tpu.memory_space<vmem>>, vector<1x64x256xf32>
    tpu.vector_store %arg4[%c0_14, %c0_15, %c0_16], %18 {strides = array<i32>} : memref<1x64x256xf32, #tpu.memory_space<vmem>>, vector<1x64x256xf32>,
    return
  }
  func.func @transform_0(%arg0: i32) -> (i32, i32, i32) {
    %c0_i32 = arith.constant 0 : i32
    %c0_i32_0 = arith.constant 0 : i32
    %c0_i32_1 = arith.constant 0 : i32
    return %arg0, %c0_i32, %c0_i32_0 : i32, i32, i32
  }
  func.func @transform_1(%arg0: i32) -> (i32, i32) {
    %c0_i32 = arith.constant 0 : i32
    %c0_i32_0 = arith.constant 0 : i32
    %c0_i32_1 = arith.constant 0 : i32
    return %c0_i32, %c0_i32_0 : i32, i32
  }
  func.func @transform_2(%arg0: i32) -> (i32, i32) {
    %c0_i32 = arith.constant 0 : i32
    %c0_i32_0 = arith.constant 0 : i32
    %c0_i32_1 = arith.constant 0 : i32
    return %c0_i32, %c0_i32_0 : i32, i32
  }
  func.func @transform_3(%arg0: i32) -> (i32, i32, i32) {
    %c0_i32 = arith.constant 0 : i32
    %c0_i32_0 = arith.constant 0 : i32
    %c0_i32_1 = arith.constant 0 : i32
    return %arg0, %c0_i32, %c0_i32_0 : i32, i32, i32
  }
}

</mosaic_0001>

<llo_original>
// kernel: tpu_custom_call.1
$region0: #{tpu_custom_call.1}
  #allocation0 [shape = 'u32[]', space=smem, size = 0x4, offset = 0x4, fixed_abs, tag = 'smem constant byte address 0x4 - core index']
  #allocation1 [shape = 'u32[72,128]{1,0:T(1,128)}', space=vmem, size = 0x9000, scoped, tag = 'internal scratch']
  %s0 = inlined_call_operand.hbm [shape: f32[2,64,256], index: 0, kind: input, shape index: {}]
  %s1 = inlined_call_operand.vmem [shape: f32[64,4], index: 1, kind: input, shape index: {}]
  %s2 = inlined_call_operand.vmem [shape: f32[4,64], index: 2, kind: input, shape index: {}]
  %s3 = inlined_call_operand.hbm [shape: f32[2,64,256], index: 3, kind: output, shape index: {}]
  %s4 = sld [smem:[#allocation0]]
  $region49: #{tpu_custom_call.1} parent=0
    _
  %s6 = ssub.s32 1, %s4
  %s7 = scalar_select 0, %s6, %s4
  $region1: #{tpu_custom_call.1} parent=0
    #allocation2 [shape = 'u8[131072]{0}', space=vmem, size = 0x20000, scoped, tag = 'input window, operand 0']
    #allocation3 [shape = 's32[2]{0}', space=sflag, size = 0x8, scoped, tag = 'scoped memory for tpu_custom_call.1']
    #allocation4 [shape = 's32[2]{0}', space=sflag, size = 0x8, scoped, tag = 'scoped memory for tpu_custom_call.1']
    #allocation5 [shape = 'u8[131072]{0}', space=vmem, size = 0x20000, scoped, tag = 'output window, operand 0']
    %8 = vsyncpa [#allocation3], 0
    %s9 = scalar_lea.sflag [#allocation3], 1
    %10 = vsyncpa %s9, 0
    %11 = vsyncpa [#allocation4], 0
    %s12 = scalar_lea.sflag [#allocation4], 1
    %13 = vsyncpa %s12, 0
    loop: start=0, step=1, limit=4
    $region2: #{tpu_custom_call.1} parent=1 // loop_pre_header
      _
    $region3: #{tpu_custom_call.1} parent=1 // loop_header
      %s15 = sphi 0, %s19
      %p16 = scmp.ge.s32.totalorder %s15, 4
      %s25 = sphi 0, %s27
      %s28 = sphi 0, %s25
      %s29 = sphi 0, %s28
      %s45 = sphi 0, %s29
      %s49 = sphi 0, %s49
      %s51 = sphi 0, %s49
      %s52 = sphi 0, %s51
      %s66 = sphi 0, %s52
      %s70 = sphi 0, %s70
      %s72 = sphi 0, %s70
      %s73 = sphi 0, %s72
      %s87 = sphi 0, %s73
      %s93 = sphi 0, %s95
      %s96 = sphi 0, %s93
      %s97 = sphi 0, %s96
      %s113 = sphi 0, %s97
    $region4: #{tpu_custom_call.1} parent=1 // loop_header_branch
      %18 = sbr.rel (%p16) target = $region8
    $region5: #{tpu_custom_call.1} parent=1 // loop_body
      %s20 = ssub.s32 %s15, 1
      %s21 = ssub.s32 %s15, 2
      %s22 = sadd.s32 %s15, 1
      %s23 = ssub.s32 %s15, %s22
      %p24 = scmp.eq.s32.totalorder %s23, 0
      %s26 = sadd.s32 %s25, 1
      %s27 = scalar_select %p24, %s25, %s26
      %p30 = pneg %p24
      %p31 = scmp.eq.s32.totalorder %s15, 1
      %p32 = por %p30, %p31
      %p33 = scmp.ne.s32.totalorder %s25, %s28
      %p34 = scmp.eq.s32.totalorder %s15, 0
      %p35 = por %p33, %p34
      %p36 = scmp.ne.s32.totalorder %s25, %s28
      %p37 = scmp.eq.s32.totalorder %s20, 1
      %p38 = por %p36, %p37
      %p39 = scmp.ne.s32.totalorder %s28, %s29
      %p40 = scmp.eq.s32.totalorder %s20, 0
      %p41 = por %p39, %p40
      %p42 = scmp.ne.s32.totalorder %s28, %s29
      %p43 = scmp.eq.s32.totalorder %s21, 1
      %p44 = por %p42, %p43
      %p46 = scmp.ne.s32.totalorder %s29, %s45
      %p47 = scmp.eq.s32.totalorder %s21, 0
      %p48 = por %p46, %p47
      %s50 = sadd.s32 %s49, 1
      %p53 = scmp.eq.s32.totalorder %s15, 1
      %p54 = scmp.ne.s32.totalorder %s49, %s51
      %p55 = scmp.eq.s32.totalorder %s15, 0
      %p56 = por %p54, %p55
      %p57 = scmp.ne.s32.totalorder %s49, %s51
      %p58 = scmp.eq.s32.totalorder %s20, 1
      %p59 = por %p57, %p58
      %p60 = scmp.ne.s32.totalorder %s51, %s52
      %p61 = scmp.eq.s32.totalorder %s20, 0
      %p62 = por %p60, %p61
      %p63 = scmp.ne.s32.totalorder %s51, %s52
      %p64 = scmp.eq.s32.totalorder %s21, 1
      %p65 = por %p63, %p64
      %p67 = scmp.ne.s32.totalorder %s52, %s66
      %p68 = scmp.eq.s32.totalorder %s21, 0
      %p69 = por %p67, %p68
      %s71 = sadd.s32 %s70, 1
      %p74 = scmp.eq.s32.totalorder %s15, 1
      %p75 = scmp.ne.s32.totalorder %s70, %s72
      %p76 = scmp.eq.s32.totalorder %s15, 0
      %p77 = por %p75, %p76
      %p78 = scmp.ne.s32.totalorder %s70, %s72
      %p79 = scmp.eq.s32.totalorder %s20, 1
      %p80 = por %p78, %p79
      %p81 = scmp.ne.s32.totalorder %s72, %s73
      %p82 = scmp.eq.s32.totalorder %s20, 0
      %p83 = por %p81, %p82
      %p84 = scmp.ne.s32.totalorder %s72, %s73
      %p85 = scmp.eq.s32.totalorder %s21, 1
      %p86 = por %p84, %p85
      %p88 = scmp.ne.s32.totalorder %s73, %s87
      %p89 = scmp.eq.s32.totalorder %s21, 0
      %p90 = por %p88, %p89
      %s91 = ssub.s32 %s15, %s22
      %p92 = scmp.eq.s32.totalorder %s91, 0
      %s94 = sadd.s32 %s93, 1
      %s95 = scalar_select %p92, %s93, %s94
      %p98 = pneg %p92
      %p99 = scmp.eq.s32.totalorder %s15, 1
      %p100 = por %p98, %p99
      %p101 = scmp.ne.s32.totalorder %s93, %s96
      %p102 = scmp.eq.s32.totalorder %s15, 0
      %p103 = por %p101, %p102
      %p104 = scmp.ne.s32.totalorder %s93, %s96
      %p105 = scmp.eq.s32.totalorder %s20, 1
      %p106 = por %p104, %p105
      %p107 = scmp.ne.s32.totalorder %s96, %s97
      %p108 = scmp.eq.s32.totalorder %s20, 0
      %p109 = por %p107, %p108
      %p110 = scmp.ne.s32.totalorder %s96, %s97
      %p111 = scmp.eq.s32.totalorder %s21, 1
      %p112 = por %p110, %p111
      %p114 = scmp.ne.s32.totalorder %s97, %s113
      %p115 = scmp.eq.s32.totalorder %s21, 0
      %p116 = por %p114, %p115
      %p117 = scmp.le.s32.totalorder 1, %s15
      %p118 = scmp.lt.s32.totalorder %s15, 3
      %p119 = pnand %p117, %p118
      %p120 = pneg %p119
      // Predicated region
      $region9: #{tpu_custom_call.1} parent=5 // pred_check
        _
      $region10: #{tpu_custom_call.1} parent=5 // pred_check_branch
        %122 = sbr.rel (%p119) target = $region12
      $region11: #{tpu_custom_call.1} parent=5 // pred_region
        %s123 = ssub.s32 %s15, 1
        // Predicated region
        $region13: #{tpu_custom_call.1} parent=11 // pred_check
          %p124 = pneg %p62
        $region14: #{tpu_custom_call.1} parent=11 // pred_check_branch
          %126 = sbr.rel (%p124) target = $region16
        $region15: #{tpu_custom_call.1} parent=11 // pred_region
          _
        $region16: #{tpu_custom_call.1} parent=11 // pred_fallthru
          _
        // Predicated region
        $region17: #{tpu_custom_call.1} parent=11 // pred_check
          %p127 = pneg %p83
        $region18: #{tpu_custom_call.1} parent=11 // pred_check_branch
          %129 = sbr.rel (%p127) target = $region20
        $region19: #{tpu_custom_call.1} parent=11 // pred_region
          _
        $region20: #{tpu_custom_call.1} parent=11 // pred_fallthru
          _
      $region12: #{tpu_custom_call.1} parent=5 // pred_fallthru
        _
      %p130 = scmp.lt.s32.totalorder %s15, 2
      // Predicated region
      $region21: #{tpu_custom_call.1} parent=5 // pred_check
        %p131 = pneg %p130
      $region22: #{tpu_custom_call.1} parent=5 // pred_check_branch
        %133 = sbr.rel (%p131) target = $region24
      $region23: #{tpu_custom_call.1} parent=5 // pred_region
        // Predicated region
        $region25: #{tpu_custom_call.1} parent=23 // pred_check
          %p134 = pneg %p35
        $region26: #{tpu_custom_call.1} parent=23 // pred_check_branch
          %136 = sbr.rel (%p134) target = $region28
        $region27: #{tpu_custom_call.1} parent=23 // pred_region
          %s137 = sand.u32 %s25, 1
          %s138 = scalar_lea.sflag [#allocation3], %s137
          %s139 = sand.u32 %s25, 1
          %s140 = smul.addr %s139, 128
          %s141 = scalar_lea.vmem [#allocation2], %s140
          %143 = vsyncadd %s138, 0
          %s144 = smul.addr %s15, 16
          %s145 = smul.addr %s144, 8
          %s146 = scalar_lea.hbm %s0, %s145
          %s147 = sshll.u32 %s146, 4
          %s148 = int_to_ptr.hbm [resolvable:$true] %s147
          %s149 = sshll.u32 %s141, 4
          %s150 = int_to_ptr.vmem [resolvable:$true] %s149
          %155 = dma.hbm_to_vmem [thread:$0]  %s148, 2048, %s150, %s138, 256, 256, 16
        $region28: #{tpu_custom_call.1} parent=23 // pred_fallthru
          _
      $region24: #{tpu_custom_call.1} parent=5 // pred_fallthru
        _
      %p156 = scmp.le.s32.totalorder 1, %s15
      %p157 = scmp.lt.s32.totalorder %s15, 3
      %p158 = pnand %p156, %p157
      %p159 = pneg %p158
      // Predicated region
      $region29: #{tpu_custom_call.1} parent=5 // pred_check
        _
      $region30: #{tpu_custom_call.1} parent=5 // pred_check_branch
        %161 = sbr.rel (%p158) target = $region32
      $region31: #{tpu_custom_call.1} parent=5 // pred_region
        %s162 = ssub.s32 %s15, 1
        %s163 = sand.u32 %s28, 1
        %s164 = scalar_lea.sflag [#allocation3], %s163
        %s165 = sand.u32 %s28, 1
        %s166 = smul.addr %s165, 128
        %s167 = scalar_lea.vmem [#allocation2], %s166
        // Predicated region
        $region33: #{tpu_custom_call.1} parent=31 // pred_check
          %p168 = pneg %p41
        $region34: #{tpu_custom_call.1} parent=31 // pred_check_branch
          %170 = sbr.rel (%p168) target = $region36
        $region35: #{tpu_custom_call.1} parent=31 // pred_region
          %172 = dma.done %s164, 2048
        $region36: #{tpu_custom_call.1} parent=31 // pred_fallthru
          _
        %s173 = sand.u32 %s28, 1
        %s174 = scalar_lea.sflag [#allocation3], %s173
        %s175 = sand.u32 %s28, 1
        %s176 = smul.addr %s175, 128
        %s177 = scalar_lea.vmem [#allocation2], %s176
        %p178 = pneg %p41
        %p179 = pneg %p38
        %p180 = pneg %p62
        %p181 = pneg %p59
        %p182 = pneg %p83
        %p183 = pneg %p80
        %p184 = pneg %p109
        %p185 = pneg %p106
        %s186 = sand.u32 %s96, 1
        %s187 = scalar_lea.sflag [#allocation4], %s186
        %s188 = sand.u32 %s96, 1
        %s189 = smul.addr %s188, 128
        %s190 = scalar_lea.vmem [#allocation5], %s189
        %v191 = vld [vmem:[%s167] sm:$0xff]
        %v192 = vld [vmem:[%s167 + $0x8] sm:$0xff]
        %v193 = vld [vmem:[%s167 + $0x10] sm:$0xff]
        %v194 = vld [vmem:[%s167 + $0x18] sm:$0xff]
        %v195 = vld [vmem:[%s167 + $0x20] sm:$0xff]
        %v196 = vld [vmem:[%s167 + $0x28] sm:$0xff]
        %v197 = vld [vmem:[%s167 + $0x30] sm:$0xff]
        %v198 = vld [vmem:[%s167 + $0x38] sm:$0xff]
        %v199 = vld [vmem:[%s167 + $0x40] sm:$0xff]
        %v200 = vld [vmem:[%s167 + $0x48] sm:$0xff]
        %v201 = vld [vmem:[%s167 + $0x50] sm:$0xff]
        %v202 = vld [vmem:[%s167 + $0x58] sm:$0xff]
        %v203 = vld [vmem:[%s167 + $0x60] sm:$0xff]
        %v204 = vld [vmem:[%s167 + $0x68] sm:$0xff]
        %v205 = vld [vmem:[%s167 + $0x70] sm:$0xff]
        %v206 = vld [vmem:[%s167 + $0x78] sm:$0xff]
        %v207 = vadd.f32 %v191, %v192
        %208 = vadd.xlane.f32.xlu0 %v207
        %v209 = vpop.xlane.xlu0 %208
        %v210 = vadd.f32 %v193, %v194
        %211 = vadd.xlane.f32.xlu0 %v210
        %v212 = vpop.xlane.xlu0 %211
        %v213 = vadd.f32 %v195, %v196
        %214 = vadd.xlane.f32.xlu0 %v213
        %v215 = vpop.xlane.xlu0 %214
        %v216 = vadd.f32 %v197, %v198
        %217 = vadd.xlane.f32.xlu0 %v216
        %v218 = vpop.xlane.xlu0 %217
        %v219 = vadd.f32 %v199, %v200
        %220 = vadd.xlane.f32.xlu0 %v219
        %v221 = vpop.xlane.xlu0 %220
        %v222 = vadd.f32 %v201, %v202
        %223 = vadd.xlane.f32.xlu0 %v222
        %v224 = vpop.xlane.xlu0 %223
        %v225 = vadd.f32 %v203, %v204
        %226 = vadd.xlane.f32.xlu0 %v225
        %v227 = vpop.xlane.xlu0 %226
        %v228 = vadd.f32 %v205, %v206
        %229 = vadd.xlane.f32.xlu0 %v228
        %v230 = vpop.xlane.xlu0 %229
        %v231 = vrcp.pop 256.0
        %v232 = vmul.f32 256.0, %v231
        %v233 = vsub.f32 1.0, %v232
        %v234 = vmul.f32 %v231, %v233
        %v235 = vadd.f32 %v231, %v234
        %vm236 = vweird.f32 %v231
        %v237 = vsel %vm236, %v231, %v235
        %v238 = vmul.f32 %v209, %v237
        %v239 = vmul.f32 %v212, %v237
        %v240 = vmul.f32 %v215, %v237
        %v241 = vmul.f32 %v218, %v237
        %v242 = vmul.f32 %v221, %v237
        %v243 = vmul.f32 %v224, %v237
        %v244 = vmul.f32 %v227, %v237
        %v245 = vmul.f32 %v230, %v237
        %v246 = vld [vmem:[%s1] sm:$0xff]
        %v247 = vld [vmem:[%s1 + $0x8] sm:$0xff]
        %v248 = vld [vmem:[%s1 + $0x10] sm:$0xff]
        %v249 = vld [vmem:[%s1 + $0x18] sm:$0xff]
        %v250 = vld [vmem:[%s1 + $0x20] sm:$0xff]
        %v251 = vld [vmem:[%s1 + $0x28] sm:$0xff]
        %v252 = vld [vmem:[%s1 + $0x30] sm:$0xff]
        %v253 = vld [vmem:[%s1 + $0x38] sm:$0xff]
        %v262 = vlaneseq
        %v263 = vand.u32 %v262, 127
        %v264 = vperm.slane %v238, %v263
        %v265 = vadd.s32 %v263, 4294967288
        %v266 = vperm.slane %v239, %v265
        %vm267 = vcmask 130112
        %v268 = vsel %vm267, %v266, %v264
        %v269 = vadd.s32 %v263, 4294967280
        %v270 = vperm.slane %v240, %v269
        %vm271 = vcmask 195712
        %v272 = vsel %vm271, %v270, %v268
        %v273 = vadd.s32 %v263, 4294967272
        %v274 = vperm.slane %v241, %v273
        %vm275 = vcmask 261312
        %v276 = vsel %vm275, %v274, %v272
        %v277 = vadd.s32 %v263, 4294967264
        %v278 = vperm.slane %v242, %v277
        %vm279 = vcmask 326912
        %v280 = vsel %vm279, %v278, %v276
        %v281 = vadd.s32 %v263, 4294967256
        %v282 = vperm.slane %v243, %v281
        %vm283 = vcmask 392512
        %v284 = vsel %vm283, %v282, %v280
        %v285 = vadd.s32 %v263, 4294967248
        %v286 = vperm.slane %v244, %v285
        %vm287 = vcmask 458112
        %v288 = vsel %vm287, %v286, %v284
        %v289 = vadd.s32 %v263, 4294967240
        %v290 = vperm.slane %v245, %v289
        %vm291 = vcmask 523712
        %v292 = vsel %vm291, %v290, %v288
        %vm293 = vcmask 523264
        %v294 = vsel %vm293, %v292, 0
        %296 = vmatpush.msra.mxu0 0.0
        %297 = vmatpush.msra.mxu0 0.0
        %298 = vmatpush.msra.mxu0 0.0
        %299 = vmatpush.msra.mxu0 0.0
        %300 = vmatpush.msra.mxu0 0.0
        %301 = vmatpush.msra.mxu0 0.0
        %302 = vmatpush.msra.mxu0 0.0
        %303 = vmatpush.msra.mxu0 0.0
        %304 = vmatpush.msra.mxu0 %v253
        %305 = vmatpush.msra.mxu0 %v252
        %306 = vmatpush.msra.mxu0 %v251
        %307 = vmatpush.msra.mxu0 %v250
        %308 = vmatpush.msra.mxu0 %v249
        %309 = vmatpush.msra.mxu0 %v248
        %310 = vmatpush.msra.mxu0 %v247
        %311 = vmatpush.msra.mxu0 %v246
        %312 = vmatmul.f32.gmra.mxu0 %v294
        %v313 = vpop.f32.mrf.mxu0
        %v314 = vadd.f32 0.0, %v313
        %315 = vdwg.mxu0
        %v316 = vmax.f32 %v314, 0.0
        %v317 = vld [vmem:[%s2] sm:$0xf]
        %vm318 = vcmask 31744
        %v320 = vsel %vm318, %v316, 0
        %vm322 = vcmask 1043456
        %v324 = vsel %vm322, %v317, 0
        %326 = vmatpush.msra.mxu0 0.0
        %327 = vmatpush.msra.mxu0 0.0
        %328 = vmatpush.msra.mxu0 0.0
        %329 = vmatpush.msra.mxu0 0.0
        %330 = vmatpush.msra.mxu0 0.0
        %331 = vmatpush.msra.mxu0 0.0
        %332 = vmatpush.msra.mxu0 0.0
        %333 = vmatpush.msra.mxu0 0.0
        %334 = vmatpush.msra.mxu0 0.0
        %335 = vmatpush.msra.mxu0 0.0
        %336 = vmatpush.msra.mxu0 0.0
        %337 = vmatpush.msra.mxu0 0.0
        %338 = vmatpush.msra.mxu0 0.0
        %339 = vmatpush.msra.mxu0 0.0
        %340 = vmatpush.msra.mxu0 0.0
        %341 = vmatpush.msra.mxu0 %v324
        %342 = vmatmul.f32.gmra.mxu0 %v320
        %v343 = vpop.f32.mrf.mxu0
        %v344 = vadd.f32 0.0, %v343
        %345 = vdwg.mxu0
        %v346 = vxor.u32 %v344, 2147483648
        %v347 = vmul.f32 %v346, 1.442695
        %v348 = vpow.pop %v347
        %v349 = vadd.f32 %v348, 1.0
        %v350 = vrcp.pop %v349
        %v351 = vmul.f32 %v349, %v350
        %v352 = vsub.f32 1.0, %v351
        %v353 = vmul.f32 %v350, %v352
        %v354 = vadd.f32 %v350, %v353
        %vm355 = vweird.f32 %v349
        %vm356 = vweird.f32 %v350
        %vm357 = vmor %vm355, %vm356
        %v358 = vsel %vm357, %v350, %v354
        %v359 = vand.u32 2147483647, %v349
        %vm360 = vcmp.eq.f32.partialorder %v359, 8.507059e+37
        %v361 = vand.u32 %v349, 2147483648
        %v362 = vor.u32 1.1754944e-38, %v361
        %v363 = vsel %vm360, %v362, %v358
        %v364 = vmul.f32 1.0, %v363
        %v365 = vperm.slane %v364, 0
        %v366 = vlaneseq
        %v367 = vshrl.u32 %v366, 7
        %369 = vset.pattern.permute.xlu0 %v367
        %370 = vperm.xlu0 %369, %v365
        %v371 = vpop.permute.xlu0 %370
        %v372 = vlaneseq
        %v373 = vshrl.u32 %v372, 7
        %v374 = vadd.s32 %v373, 8
        %375 = vset.pattern.permute.xlu0 %v374
        %376 = vperm.xlu0 %375, %v365
        %v377 = vpop.permute.xlu0 %376
        %v378 = vlaneseq
        %v379 = vshrl.u32 %v378, 7
        %v380 = vadd.s32 %v379, 16
        %381 = vset.pattern.permute.xlu0 %v380
        %382 = vperm.xlu0 %381, %v365
        %v383 = vpop.permute.xlu0 %382
        %v384 = vlaneseq
        %v385 = vshrl.u32 %v384, 7
        %v386 = vadd.s32 %v385, 24
        %387 = vset.pattern.permute.xlu0 %v386
        %388 = vperm.xlu0 %387, %v365
        %v389 = vpop.permute.xlu0 %388
        %v390 = vlaneseq
        %v391 = vshrl.u32 %v390, 7
        %v392 = vadd.s32 %v391, 32
        %393 = vset.pattern.permute.xlu0 %v392
        %394 = vperm.xlu0 %393, %v365
        %v395 = vpop.permute.xlu0 %394
        %v396 = vlaneseq
        %v397 = vshrl.u32 %v396, 7
        %v398 = vadd.s32 %v397, 40
        %399 = vset.pattern.permute.xlu0 %v398
        %400 = vperm.xlu0 %399, %v365
        %v401 = vpop.permute.xlu0 %400
        %v402 = vlaneseq
        %v403 = vshrl.u32 %v402, 7
        %v404 = vadd.s32 %v403, 48
        %405 = vset.pattern.permute.xlu0 %v404
        %406 = vperm.xlu0 %405, %v365
        %v407 = vpop.permute.xlu0 %406
        %v408 = vlaneseq
        %v409 = vshrl.u32 %v408, 7
        %v410 = vadd.s32 %v409, 56
        %411 = vset.pattern.permute.xlu0 %v410
        %412 = vperm.xlu0 %411, %v365
        %v413 = vpop.permute.xlu0 %412
        %v414 = vmul.f32 %v191, %v371
        %v415 = vmul.f32 %v192, %v371
        %v416 = vmul.f32 %v193, %v377
        %v417 = vmul.f32 %v194, %v377
        %v418 = vmul.f32 %v195, %v383
        %v419 = vmul.f32 %v196, %v383
        %v420 = vmul.f32 %v197, %v389
        %v421 = vmul.f32 %v198, %v389
        %v422 = vmul.f32 %v199, %v395
        %v423 = vmul.f32 %v200, %v395
        %v424 = vmul.f32 %v201, %v401
        %v425 = vmul.f32 %v202, %v401
        %v426 = vmul.f32 %v203, %v407
        %v427 = vmul.f32 %v204, %v407
        %v428 = vmul.f32 %v205, %v413
        %v429 = vmul.f32 %v206, %v413
        %430 = vst [vmem:[%s190] sm:$0xff] %v414
        %431 = vst [vmem:[%s190 + $0x8] sm:$0xff] %v415
        %432 = vst [vmem:[%s190 + $0x10] sm:$0xff] %v416
        %433 = vst [vmem:[%s190 + $0x18] sm:$0xff] %v417
        %434 = vst [vmem:[%s190 + $0x20] sm:$0xff] %v418
        %435 = vst [vmem:[%s190 + $0x28] sm:$0xff] %v419
        %436 = vst [vmem:[%s190 + $0x30] sm:$0xff] %v420
        %437 = vst [vmem:[%s190 + $0x38] sm:$0xff] %v421
        %438 = vst [vmem:[%s190 + $0x40] sm:$0xff] %v422
        %439 = vst [vmem:[%s190 + $0x48] sm:$0xff] %v423
        %440 = vst [vmem:[%s190 + $0x50] sm:$0xff] %v424
        %441 = vst [vmem:[%s190 + $0x58] sm:$0xff] %v425
        %442 = vst [vmem:[%s190 + $0x60] sm:$0xff] %v426
        %443 = vst [vmem:[%s190 + $0x68] sm:$0xff] %v427
        %444 = vst [vmem:[%s190 + $0x70] sm:$0xff] %v428
        %445 = vst [vmem:[%s190 + $0x78] sm:$0xff] %v429
        %s446 = sand.u32 %s96, 1
        %s447 = scalar_lea.sflag [#allocation4], %s446
        %s448 = sand.u32 %s96, 1
        %s449 = smul.addr %s448, 128
        %s450 = scalar_lea.vmem [#allocation5], %s449
        // Predicated region
        $region37: #{tpu_custom_call.1} parent=31 // pred_check
          %p451 = pneg %p106
        $region38: #{tpu_custom_call.1} parent=31 // pred_check_branch
          %453 = sbr.rel (%p451) target = $region40
        $region39: #{tpu_custom_call.1} parent=31 // pred_region
          %455 = vsyncadd %s447, 0
          %s456 = smul.addr %s20, 16
          %s457 = smul.addr %s456, 8
          %s458 = scalar_lea.hbm %s3, %s457
          %s459 = sshll.u32 %s450, 4
          %s460 = int_to_ptr.vmem [resolvable:$true] %s459
          %s461 = sshll.u32 %s458, 4
          %s462 = int_to_ptr.hbm [resolvable:$true] %s461
          %467 = dma.vmem_to_hbm [thread:$0]  %s460, 2048, %s462, %s447, 256, 256, 16
        $region40: #{tpu_custom_call.1} parent=31 // pred_fallthru
          _
      $region32: #{tpu_custom_call.1} parent=5 // pred_fallthru
        _
      %p468 = scmp.le.s32.totalorder 2, %s15
      // Predicated region
      $region41: #{tpu_custom_call.1} parent=5 // pred_check
        %p469 = pneg %p468
      $region42: #{tpu_custom_call.1} parent=5 // pred_check_branch
        %471 = sbr.rel (%p469) target = $region44
      $region43: #{tpu_custom_call.1} parent=5 // pred_region
        %s472 = ssub.s32 %s15, 2
        // Predicated region
        $region45: #{tpu_custom_call.1} parent=43 // pred_check
          %p473 = pneg %p112
        $region46: #{tpu_custom_call.1} parent=43 // pred_check_branch
          %475 = sbr.rel (%p473) target = $region48
        $region47: #{tpu_custom_call.1} parent=43 // pred_region
          %s476 = sand.u32 %s97, 1
          %s477 = scalar_lea.sflag [#allocation4], %s476
          %s478 = sand.u32 %s97, 1
          %s479 = smul.addr %s478, 128
          %s480 = scalar_lea.vmem [#allocation5], %s479
          %482 = dma.done %s477, 2048
        $region48: #{tpu_custom_call.1} parent=43 // pred_fallthru
          _
      $region44: #{tpu_custom_call.1} parent=5 // pred_fallthru
        _
    $region6: #{tpu_custom_call.1} parent=1 // loop_footer
      %s19 = sadd.s32 1, %s15
    $region7: #{tpu_custom_call.1} parent=1 // loop_footer_branch
      %14 = sbr.rel target = $region3
    $region8: #{tpu_custom_call.1} parent=1 // loop_exit
      _
    %483 = vsyncpa [#allocation3], 1
    %s484 = scalar_lea.sflag [#allocation3], 1
    %485 = vsyncpa %s484, 1
    %486 = vsyncpa [#allocation4], 1
    %s487 = scalar_lea.sflag [#allocation4], 1
    %488 = vsyncpa %s487, 1

</llo_original>
